<compile_context>
chip_gen: v7x
topology: tpu7x:2x2x1
jax: 0.10.0
libtpu: 0.0.40
codegen_flags: <defaults>
</compile_context>

<pallas_src>
import jax
import jax.numpy as jnp
from jax.experimental import pallas as pl
from jax.experimental.pallas import tpu as pltpu

LANE = 128
SUBLANE = 8


def _round_up(x, m):
    return ((x + m - 1) // m) * m


def _cdiv(a, b):
    return -(-a // b)


def value_network_kernel(x_ref, w1_ref, b1_ref, w2_ref, b2_ref, w3_ref, b3_ref,
                         out_ref):
    # fc1 + ReLU: bf16 activations x bf16 weights on the MXU, f32 accumulation.
    h1 = jnp.dot(x_ref[...], w1_ref[...],
                 preferred_element_type=jnp.float32)                  # (TB, Hp)
    h1 = jnp.maximum(h1 + b1_ref[...], 0.0)

    # fc2 + ReLU
    h2 = jnp.dot(h1.astype(w2_ref.dtype), w2_ref[...],
                 preferred_element_type=jnp.float32)                  # (TB, Hp)
    h2 = jnp.maximum(h2 + b2_ref[...], 0.0)

    # fc3 head (single output unit): VPU multiply + XLU lane reduction keeps the
    # N=1 column off the MXU; bias is a scalar from SMEM (scalar path).
    v = jnp.sum(h2 * w3_ref[...], axis=-1, keepdims=True)             # (TB, 1)
    out_ref[...] = v + b3_ref[0, 0]


def _vmem_limit_bytes(TB, S, Hp, w_itemsize):
    def tile_bytes(rows, cols, itemsize):
        return (_round_up(max(rows, 1), SUBLANE)
                * _round_up(max(cols, 1), LANE) * itemsize)

    # Single-buffered resident operands (Buffered(1)).
    resident = (tile_bytes(S, Hp, w_itemsize)        # w1
                + tile_bytes(Hp, Hp, w_itemsize)     # w2
                + 3 * tile_bytes(1, Hp, 4))          # b1, b2, w3 (f32)
    # Double-buffered streamed operands.
    streamed = 2 * tile_bytes(TB, S, w_itemsize) + 2 * tile_bytes(TB, 1, 4)
    # Live f32 temporaries (h1, h2).
    temps = 2 * tile_bytes(TB, Hp, 4)
    est = resident + streamed + temps

    cap = 64 * 1024 * 1024                            # conservative (v7x per-TC)
    try:
        info = pltpu.get_tpu_info()
        cap = int(getattr(info, "vmem_capacity_bytes", cap) or cap)
    except Exception:
        pass
    # 2x headroom + 8 MiB slack, floored above the v5e 16 MiB scoped default,
    # capped at 3/4 of physical VMEM for the current generation.
    return int(min(max(2 * est + (8 << 20), 32 << 20), (cap * 3) // 4))


def value_network_forward(state, params, *, block_b=512,
                          weights_dtype=jnp.bfloat16):
    """state: (B, state_dim) f32; params weights are (in_features, out_features)."""
    B, S = state.shape
    H = params["w1"].shape[1]
    Hp = _round_up(H, LANE)

    # Batch tile: large enough to amortize the ~0.35us/step grid overhead, small
    # enough that the grid has >= 2 steps (when B allows) so both v7x
    # TensorCores get work via the "parallel" axis.
    if B <= SUBLANE:
        TB = B                                        # block == full batch dim
    else:
        TB = min(block_b, _round_up(_cdiv(B, 2), SUBLANE))
    num_tiles = _cdiv(B, TB)
    # Ragged last tile: Pallas masks the partial block (rows are independent
    # through the matmuls; OOB stores are dropped) -> no jnp.pad of the batch.

    def pad_to(a, rows, cols):
        return jnp.pad(a, ((0, rows - a.shape[0]), (0, cols - a.shape[1])))

    # Stream the batch in bf16 (halves per-step DMA bytes + VMEM footprint).
    x = state.astype(weights_dtype)                                   # (B, S)

    # Zero-pad hidden dim to a lane-dense multiple of 128 (numerically exact:
    # padded units see zero weights/biases -> ReLU(0)=0 -> contribute 0).
    w1 = pad_to(params["w1"], S, Hp).astype(weights_dtype)            # (S, Hp)
    b1 = pad_to(params["b1"], 1, Hp).astype(jnp.float32)              # (1, Hp)
    w2 = pad_to(params["w2"], Hp, Hp).astype(weights_dtype)           # (Hp, Hp)
    b2 = pad_to(params["b2"], 1, Hp).astype(jnp.float32)              # (1, Hp)
    w3 = pad_to(params["w3"].T, 1, Hp).astype(jnp.float32)            # (1, Hp)
    b3 = params["b3"].reshape(1, 1).astype(jnp.float32)               # (1, 1)

    wb = jnp.dtype(weights_dtype).itemsize
    flops = 2 * B * (S * Hp + Hp * Hp + Hp)
    bytes_accessed = int(x.size * wb
                         + w1.size * wb + w2.size * wb
                         + (b1.size + b2.size + w3.size + b3.size) * 4
                         + B * 4)
    vmem_limit = _vmem_limit_bytes(TB, S, Hp, wb)

    const = lambda i: (0, 0)            # resident operands: same block each step
    resident_once = dict(pipeline_mode=pl.Buffered(1))   # no double-buffering

    out = pl.pallas_call(
        value_network_kernel,
        out_shape=jax.ShapeDtypeStruct((B, 1), jnp.float32),
        grid_spec=pltpu.PrefetchScalarGridSpec(
            num_scalar_prefetch=0,
            grid=(num_tiles,),
            in_specs=[
                pl.BlockSpec((TB, S), lambda i: (i, 0)),              # x stream
                pl.BlockSpec((S, Hp), const, **resident_once),        # w1
                pl.BlockSpec((1, Hp), const, **resident_once),        # b1
                pl.BlockSpec((Hp, Hp), const, **resident_once),       # w2
                pl.BlockSpec((1, Hp), const, **resident_once),        # b2
                pl.BlockSpec((1, Hp), const, **resident_once),        # w3 row
                pl.BlockSpec((1, 1), const,
                             memory_space=pltpu.MemorySpace.SMEM),    # b3 scalar
            ],
            out_specs=pl.BlockSpec((TB, 1), lambda i: (i, 0)),
        ),
        compiler_params=pltpu.CompilerParams(
            dimension_semantics=("parallel",),
            vmem_limit_bytes=vmem_limit,
        ),
        cost_estimate=pl.CostEstimate(flops=flops, transcendentals=0,
                                      bytes_accessed=bytes_accessed),
    )(x, w1, b1, w2, b2, w3, b3)

    return out


def init_params(key, state_dim, hidden_dim):
    """PyTorch-Linear-style init (uniform +/- 1/sqrt(fan_in)); weights stored (in, out)."""
    ks = jax.random.split(key, 6)

    def lin(kw, kb, fan_in, fan_out):
        bound = 1.0 / jnp.sqrt(jnp.float32(fan_in))
        w = jax.random.uniform(kw, (fan_in, fan_out), jnp.float32, -bound, bound)
        b = jax.random.uniform(kb, (1, fan_out), jnp.float32, -bound, bound)
        return w, b

    w1, b1 = lin(ks[0], ks[1], state_dim, hidden_dim)
    w2, b2 = lin(ks[2], ks[3], hidden_dim, hidden_dim)
    w3, b3 = lin(ks[4], ks[5], hidden_dim, 1)
    return {"w1": w1, "b1": b1, "w2": w2, "b2": b2, "w3": w3, "b3": b3}


def reference_forward(state, params, *, weights_dtype=jnp.bfloat16):
    """Pure-JAX reference with the same bf16 weight quantization / f32 accumulation."""
    w1 = params["w1"].astype(weights_dtype)
    w2 = params["w2"].astype(weights_dtype)
    h1 = jnp.maximum(
        jnp.dot(state.astype(weights_dtype), w1,
                preferred_element_type=jnp.float32) + params["b1"], 0.0)
    h2 = jnp.maximum(
        jnp.dot(h1.astype(weights_dtype), w2,
                preferred_element_type=jnp.float32) + params["b2"], 0.0)
    return jnp.dot(h2, params["w3"],
                   preferred_element_type=jnp.float32) + params["b3"]


if __name__ == "__main__":
    key = jax.random.PRNGKey(0)
    k_param, k_state = jax.random.split(key)

    batch, state_dim, hidden_dim = 8, 16, 32
    params = init_params(k_param, state_dim, hidden_dim)
    state = jax.random.normal(k_state, (batch, state_dim), jnp.float32)

    value = value_network_forward(state, params)
    value = jax.block_until_ready(value)

    ref = reference_forward(state, params)
    assert value.shape == (batch, 1)
    assert jnp.allclose(value, ref, atol=1e-4, rtol=1e-4), \
        float(jnp.max(jnp.abs(value - ref)))

    print("KERNEL_OK")
</pallas_src>

<mosaic_0001>
module attributes {stable_mosaic.version = 11 : i64} {
  func.func @value_network_kernel(%arg0: i32, %arg1: memref<8x16xbf16, #tpu.memory_space<vmem>>, %arg2: memref<16x128xbf16, #tpu.memory_space<vmem>>, %arg3: memref<1x128xf32, #tpu.memory_space<vmem>>, %arg4: memref<128x128xbf16, #tpu.memory_space<vmem>>, %arg5: memref<1x128xf32, #tpu.memory_space<vmem>>, %arg6: memref<1x128xf32, #tpu.memory_space<vmem>>, %arg7: memref<1x1xf32, #tpu.memory_space<smem>>, %arg8: memref<8x1xf32, #tpu.memory_space<vmem>>) attributes {dimension_semantics = [#tpu.dimension_semantics<parallel>], iteration_bounds = array<i64: 1>, scalar_prefetch = 0 : i64, scratch_operands = 0 : i64, tpu.core_type = #tpu.core_type<tc>, window_params = [{transform_indices = @transform_0, window_bounds = array<i64: 8, 16>}, {pipeline_mode = #tpu.pipeline_mode<synchronous>, transform_indices = @transform_1, window_bounds = array<i64: 16, 128>}, {pipeline_mode = #tpu.pipeline_mode<synchronous>, transform_indices = @transform_2, window_bounds = array<i64: 1, 128>}, {pipeline_mode = #tpu.pipeline_mode<synchronous>, transform_indices = @transform_3, window_bounds = array<i64: 128, 128>}, {pipeline_mode = #tpu.pipeline_mode<synchronous>, transform_indices = @transform_4, window_bounds = array<i64: 1, 128>}, {pipeline_mode = #tpu.pipeline_mode<synchronous>, transform_indices = @transform_5, window_bounds = array<i64: 1, 128>}, {transform_indices = @transform_6, window_bounds = array<i64: 1, 1>}, {transform_indices = @transform_7, window_bounds = array<i64: 8, 1>}]} {
    %c0 = arith.constant 0 : index
    %c0_0 = arith.constant 0 : index
    %0 = vector.load %arg1[%c0, %c0_0] : memref<8x16xbf16, #tpu.memory_space<vmem>>, vector<8x16xbf16>
    %c0_1 = arith.constant 0 : index
    %c0_2 = arith.constant 0 : index
    %1 = vector.load %arg2[%c0_1, %c0_2] : memref<16x128xbf16, #tpu.memory_space<vmem>>, vector<16x128xbf16>
    %cst = arith.constant dense<0.000000e+00> : vector<8x128xf32>
    %2 = tpu.matmul %0, %1, %cst {dimension_numbers = #tpu.dot_dimension_numbers<[1], [0], [0], [1], [0, 0, 1, 1], [], []>} : vector<8x16xbf16>, vector<16x128xbf16>, vector<8x128xf32> -> vector<8x128xf32>
    %c0_3 = arith.constant 0 : index
    %c0_4 = arith.constant 0 : index
    %3 = vector.load %arg3[%c0_3, %c0_4] : memref<1x128xf32, #tpu.memory_space<vmem>>, vector<1x128xf32>
    %4 = vector.broadcast %3 : vector<1x128xf32> to vector<8x128xf32>
    %5 = arith.addf %2, %4 : vector<8x128xf32>
    %cst_5 = arith.constant 0.000000e+00 : f32
    %6 = vector.broadcast %cst_5 : f32 to vector<8x128xf32>
    %7 = arith.maximumf %5, %6 : vector<8x128xf32>
    %8 = arith.truncf %7 : vector<8x128xf32> to vector<8x128xbf16>
    %c0_6 = arith.constant 0 : index
    %c0_7 = arith.constant 0 : index
    %9 = vector.load %arg4[%c0_6, %c0_7] : memref<128x128xbf16, #tpu.memory_space<vmem>>, vector<128x128xbf16>
    %cst_8 = arith.constant dense<0.000000e+00> : vector<8x128xf32>
    %10 = tpu.matmul %8, %9, %cst_8 {dimension_numbers = #tpu.dot_dimension_numbers<[1], [0], [0], [1], [0, 0, 1, 1], [], []>} : vector<8x128xbf16>, vector<128x128xbf16>, vector<8x128xf32> -> vector<8x128xf32>
    %c0_9 = arith.constant 0 : index
    %c0_10 = arith.constant 0 : index
    %11 = vector.load %arg5[%c0_9, %c0_10] : memref<1x128xf32, #tpu.memory_space<vmem>>, vector<1x128xf32>
    %12 = vector.broadcast %11 : vector<1x128xf32> to vector<8x128xf32>
    %13 = arith.addf %10, %12 : vector<8x128xf32>
    %cst_11 = arith.constant 0.000000e+00 : f32
    %14 = vector.broadcast %cst_11 : f32 to vector<8x128xf32>
    %15 = arith.maximumf %13, %14 : vector<8x128xf32>
    %c0_12 = arith.constant 0 : index
    %c0_13 = arith.constant 0 : index
    %16 = vector.load %arg6[%c0_12, %c0_13] : memref<1x128xf32, #tpu.memory_space<vmem>>, vector<1x128xf32>
    %17 = vector.broadcast %16 : vector<1x128xf32> to vector<8x128xf32>
    %18 = arith.mulf %15, %17 : vector<8x128xf32>
    %cst_14 = arith.constant dense<0.000000e+00> : vector<8xf32>
    %19 = vector.multi_reduction <add>, %18, %cst_14 [1] : vector<8x128xf32> to vector<8xf32>
    %20 = vector.shape_cast %19 : vector<8xf32> to vector<8x1xf32>
    %c0_15 = arith.constant 0 : index
    %c0_16 = arith.constant 0 : index
    %21 = memref.load %arg7[%c0_15, %c0_16] : memref<1x1xf32, #tpu.memory_space<smem>>
    %22 = vector.broadcast %21 : f32 to vector<8x1xf32>
    %23 = arith.addf %20, %22 : vector<8x1xf32>
    %c0_17 = arith.constant 0 : index
    %c0_18 = arith.constant 0 : index
    %24 = vector.load %arg8[%c0_17, %c0_18] : memref<8x1xf32, #tpu.memory_space<vmem>>, vector<8x1xf32>
    tpu.vector_store %arg8[%c0_17, %c0_18], %23 {strides = array<i32>} : memref<8x1xf32, #tpu.memory_space<vmem>>, vector<8x1xf32>,
    return
  }
  func.func @transform_0(%arg0: i32) -> (i32, i32) {
    %c0_i32 = arith.constant 0 : i32
    %c0_i32_0 = arith.constant 0 : i32
    return %arg0, %c0_i32 : i32, i32
  }
  func.func @transform_1(%arg0: i32) -> (i32, i32) {
    %c0_i32 = arith.constant 0 : i32
    %c0_i32_0 = arith.constant 0 : i32
    %c0_i32_1 = arith.constant 0 : i32
    return %c0_i32, %c0_i32_0 : i32, i32
  }
  func.func @transform_2(%arg0: i32) -> (i32, i32) {
    %c0_i32 = arith.constant 0 : i32
    %c0_i32_0 = arith.constant 0 : i32
    %c0_i32_1 = arith.constant 0 : i32
    return %c0_i32, %c0_i32_0 : i32, i32
  }
  func.func @transform_3(%arg0: i32) -> (i32, i32) {
    %c0_i32 = arith.constant 0 : i32
    %c0_i32_0 = arith.constant 0 : i32
    %c0_i32_1 = arith.constant 0 : i32
    return %c0_i32, %c0_i32_0 : i32, i32
  }
  func.func @transform_4(%arg0: i32) -> (i32, i32) {
    %c0_i32 = arith.constant 0 : i32
    %c0_i32_0 = arith.constant 0 : i32
    %c0_i32_1 = arith.constant 0 : i32
    return %c0_i32, %c0_i32_0 : i32, i32
  }
  func.func @transform_5(%arg0: i32) -> (i32, i32) {
    %c0_i32 = arith.constant 0 : i32
    %c0_i32_0 = arith.constant 0 : i32
    %c0_i32_1 = arith.constant 0 : i32
    return %c0_i32, %c0_i32_0 : i32, i32
  }
  func.func @transform_6(%arg0: i32) -> (i32, i32) {
    %c0_i32 = arith.constant 0 : i32
    %c0_i32_0 = arith.constant 0 : i32
    %c0_i32_1 = arith.constant 0 : i32
    return %c0_i32, %c0_i32_0 : i32, i32
  }
  func.func @transform_7(%arg0: i32) -> (i32, i32) {
    %c0_i32 = arith.constant 0 : i32
    %c0_i32_0 = arith.constant 0 : i32
    return %arg0, %c0_i32 : i32, i32
  }
}

</mosaic_0001>

<llo_original>
// kernel: tpu_custom_call.1
$region0: #{tpu_custom_call.1}
  #allocation0 [shape = 'u32[]', space=smem, size = 0x4, offset = 0x4, fixed_abs, tag = 'smem constant byte address 0x4 - core index']
  #allocation1 [shape = 'u32[144,128]{1,0:T(1,128)}', space=vmem, size = 0x12000, scoped, tag = 'internal scratch']
  #allocation2 [shape = 'f32[1,1]{1,0:T(1,128)S(6)}', space=smem, size = 0x200, scoped, tag = 'scoped memory for tpu_custom_call.1']
  %s0 = inlined_call_operand.hbm [shape: bf16[8,16], index: 0, kind: input, shape index: {}]
  %s1 = inlined_call_operand.hbm [shape: bf16[16,128], index: 1, kind: input, shape index: {}]
  %s2 = inlined_call_operand.vmem [shape: f32[1,128], index: 2, kind: input, shape index: {}]
  %s3 = inlined_call_operand.hbm [shape: bf16[128,128], index: 3, kind: input, shape index: {}]
  %s4 = inlined_call_operand.vmem [shape: f32[1,128], index: 4, kind: input, shape index: {}]
  %s5 = inlined_call_operand.vmem [shape: f32[1,128], index: 5, kind: input, shape index: {}]
  %s6 = inlined_call_operand.<no memory space> [shape: f32[1,1], index: 6, kind: input, shape index: {}]
  %s7 = inlined_call_operand.vmem [shape: f32[8,1], index: 7, kind: output, shape index: {}]
  %s8 = sld [smem:[#allocation0]]
  $region50: #{tpu_custom_call.1} parent=0
    _
  %s10 = ssub.s32 1, %s8
  %s11 = scalar_select 0, %s10, %s8
  %12 = sst [smem:[#allocation2]] %s6
  $region1: #{tpu_custom_call.1} parent=0
    #allocation3 [shape = 'u8[2048]{0}', space=vmem, size = 0x800, scoped, tag = 'input window, operand 0, single buffered']
    #allocation4 [shape = 's32[1]{0}', space=sflag, size = 0x4, scoped, tag = 'scoped memory for tpu_custom_call.1']
    #allocation5 [shape = 'u8[4096]{0}', space=vmem, size = 0x1000, scoped, tag = 'input window, operand 1, single buffered']
    #allocation6 [shape = 's32[1]{0}', space=sflag, size = 0x4, scoped, tag = 'scoped memory for tpu_custom_call.1']
    #allocation7 [shape = 'u8[32768]{0}', space=vmem, size = 0x8000, scoped, tag = 'input window, operand 3, single buffered']
    %13 = vsyncpa [#allocation4], 0
    %14 = vsyncpa [#allocation6], 0
    // Predicated region
    $region2: #{tpu_custom_call.1} parent=1 // pred_check
      _
    $region3: #{tpu_custom_call.1} parent=1 // pred_check_branch
      %16 = sbr.rel (0) target = $region5
    $region4: #{tpu_custom_call.1} parent=1 // pred_region
      %s18 = ssub.s32 64, 64
      %19 = vsyncadd [#allocation4], %s18
      %s21 = sshll.u32 [#allocation3], 4
      %s22 = int_to_ptr.vmem [resolvable:$true] %s21
      %24 = dma.hbm_to_vmem [thread:$0]  %s0, 64, %s22, [#allocation4]
    $region5: #{tpu_custom_call.1} parent=1 // pred_fallthru
      _
    // Predicated region
    $region6: #{tpu_custom_call.1} parent=1 // pred_check
      _
    $region7: #{tpu_custom_call.1} parent=1 // pred_check_branch
      %26 = sbr.rel (0) target = $region9
    $region8: #{tpu_custom_call.1} parent=1 // pred_region
      %s28 = ssub.s32 128, 128
      %29 = vsyncadd [#allocation6], %s28
      %s30 = sshll.u32 [#allocation5], 4
      %s31 = int_to_ptr.vmem [resolvable:$true] %s30
      %36 = dma.hbm_to_vmem [thread:$0]  %s1, 128, %s31, [#allocation6], 64, 64, 4
    $region9: #{tpu_custom_call.1} parent=1 // pred_fallthru
      _
    // Predicated region
    $region10: #{tpu_custom_call.1} parent=1 // pred_check
      _
    $region11: #{tpu_custom_call.1} parent=1 // pred_check_branch
      %38 = sbr.rel (0) target = $region13
    $region12: #{tpu_custom_call.1} parent=1 // pred_region
      _
    $region13: #{tpu_custom_call.1} parent=1 // pred_fallthru
      _
    // Predicated region
    $region14: #{tpu_custom_call.1} parent=1 // pred_check
      _
    $region15: #{tpu_custom_call.1} parent=1 // pred_check_branch
      %40 = sbr.rel (0) target = $region17
    $region16: #{tpu_custom_call.1} parent=1 // pred_region
      %s42 = ssub.s32 1024, 1024
      %43 = vsyncadd [#allocation6], %s42
      %s44 = sshll.u32 [#allocation7], 4
      %s45 = int_to_ptr.vmem [resolvable:$true] %s44
      %50 = dma.hbm_to_vmem [thread:$0]  %s3, 1024, %s45, [#allocation6], 64, 64, 4
    $region17: #{tpu_custom_call.1} parent=1 // pred_fallthru
      _
    // Predicated region
    $region18: #{tpu_custom_call.1} parent=1 // pred_check
      _
    $region19: #{tpu_custom_call.1} parent=1 // pred_check_branch
      %52 = sbr.rel (0) target = $region21
    $region20: #{tpu_custom_call.1} parent=1 // pred_region
      _
    $region21: #{tpu_custom_call.1} parent=1 // pred_fallthru
      _
    // Predicated region
    $region22: #{tpu_custom_call.1} parent=1 // pred_check
      _
    $region23: #{tpu_custom_call.1} parent=1 // pred_check_branch
      %54 = sbr.rel (0) target = $region25
    $region24: #{tpu_custom_call.1} parent=1 // pred_region
      _
    $region25: #{tpu_custom_call.1} parent=1 // pred_fallthru
      _
    // Predicated region
    $region26: #{tpu_custom_call.1} parent=1 // pred_check
      _
    $region27: #{tpu_custom_call.1} parent=1 // pred_check_branch
      %56 = sbr.rel (0) target = $region29
    $region28: #{tpu_custom_call.1} parent=1 // pred_region
      _
    $region29: #{tpu_custom_call.1} parent=1 // pred_fallthru
      _
    // Predicated region
    $region30: #{tpu_custom_call.1} parent=1 // pred_check
      _
    $region31: #{tpu_custom_call.1} parent=1 // pred_check_branch
      %58 = sbr.rel (0) target = $region33
    $region32: #{tpu_custom_call.1} parent=1 // pred_region
      %59 = dma.done [#allocation4], 64
    $region33: #{tpu_custom_call.1} parent=1 // pred_fallthru
      _
    // Predicated region
    $region34: #{tpu_custom_call.1} parent=1 // pred_check
      _
    $region35: #{tpu_custom_call.1} parent=1 // pred_check_branch
      %61 = sbr.rel (0) target = $region37
    $region36: #{tpu_custom_call.1} parent=1 // pred_region
      %62 = dma.done [#allocation6], 128
    $region37: #{tpu_custom_call.1} parent=1 // pred_fallthru
      _
    // Predicated region
    $region38: #{tpu_custom_call.1} parent=1 // pred_check
      _
    $region39: #{tpu_custom_call.1} parent=1 // pred_check_branch
      %64 = sbr.rel (0) target = $region41
    $region40: #{tpu_custom_call.1} parent=1 // pred_region
      %65 = dma.done [#allocation6], 1024
    $region41: #{tpu_custom_call.1} parent=1 // pred_fallthru
      _
    %v67 = vld [vmem:[#allocation3] sm:$0xf]
    %v68 = vld [vmem:[#allocation5] sm:$0xf]
    %v69 = vld [vmem:[#allocation5 + $0x4] sm:$0xf]
    %v70 = vld [vmem:[%s2] sm:$0x1]
    %v72 = vlaneseq
    %v73 = vshrl.u32 %v72, 7
    %v74 = vsub.s32 0, %v73
    %v75 = vrot.slane %v70, %v74
    %v79 = vunpack.c.l.b16 %v68
    %v80 = vunpack.c.l.b16 %v69
    %v81 = vpack.c.b16 %v80, %v79
    %vm83 = vcmask 130048
    %v85 = vsel %vm83, %v67, 0
    %87 = vmatprep.subr.bf16.mxu0 0
    %88 = vmatpush1.bf16.msra.mxu0 %v81
    %89 = vmatprep.subr.bf16.mxu0 0
    %90 = vmatpush1.bf16.msra.mxu0 0
    %91 = vmatprep.subr.bf16.mxu0 0
    %92 = vmatpush1.bf16.msra.mxu0 0
    %93 = vmatprep.subr.bf16.mxu0 0
    %94 = vmatpush1.bf16.msra.mxu0 0
    %95 = vmatprep.subr.bf16.mxu0 0
    %96 = vmatpush1.bf16.msra.mxu0 0
    %97 = vmatprep.subr.bf16.mxu0 0
    %98 = vmatpush1.bf16.msra.mxu0 0
    %99 = vmatprep.subr.bf16.mxu0 0
    %100 = vmatpush1.bf16.msra.mxu0 0
    %101 = vmatprep.subr.bf16.mxu0 0
    %102 = vmatpush1.bf16.msra.mxu0 0
    %103 = vmatprep.subr.bf16.mxu0 0
    %104 = vmatpush1.bf16.msra.mxu0 0
    %105 = vmatprep.subr.bf16.mxu0 0
    %106 = vmatpush1.bf16.msra.mxu0 0
    %107 = vmatprep.subr.bf16.mxu0 0
    %108 = vmatpush1.bf16.msra.mxu0 0
    %109 = vmatprep.subr.bf16.mxu0 0
    %110 = vmatpush1.bf16.msra.mxu0 0
    %111 = vmatprep.subr.bf16.mxu0 0
    %112 = vmatpush1.bf16.msra.mxu0 0
    %113 = vmatprep.subr.bf16.mxu0 0
    %114 = vmatpush1.bf16.msra.mxu0 0
    %115 = vmatprep.subr.bf16.mxu0 0
    %116 = vmatpush1.bf16.msra.mxu0 0
    %117 = vmatprep.subr.bf16.mxu0 0
    %118 = vmatpush1.bf16.msra.mxu0 0
    %119 = vmatprep.mubr.bf16.mxu0 0
    %120 = vmatmul.mubr.bf16.gmra.mrb[0].mxu0 %v85
    %v121 = vpop.f32.mrb[0].mxu0
    %v122 = vadd.f32 %v75, %v121
    %v123 = vpop.f32.mrb[0].mxu0
    %v124 = vpop.f32.mrb[0].mxu0
    %v125 = vpop.f32.mrb[0].mxu0
    %126 = vdwg.mxu0
    %v127 = vmax.f32 %v122, 0.0
    %v128 = vpack.c.bf16 %v127, %v127
    %v129 = vld [vmem:[#allocation7] sm:$0xf]
    %v130 = vld [vmem:[#allocation7 + $0x4] sm:$0xf]
    %v131 = vld [vmem:[#allocation7 + $0x8] sm:$0xf]
    %v132 = vld [vmem:[#allocation7 + $0xc] sm:$0xf]
    %v133 = vld [vmem:[#allocation7 + $0x10] sm:$0xf]
    %v134 = vld [vmem:[#allocation7 + $0x14] sm:$0xf]
    %v135 = vld [vmem:[#allocation7 + $0x18] sm:$0xf]
    %v136 = vld [vmem:[#allocation7 + $0x1c] sm:$0xf]
    %v137 = vld [vmem:[#allocation7 + $0x20] sm:$0xf]
    %v138 = vld [vmem:[#allocation7 + $0x24] sm:$0xf]
    %v139 = vld [vmem:[#allocation7 + $0x28] sm:$0xf]
    %v140 = vld [vmem:[#allocation7 + $0x2c] sm:$0xf]
    %v141 = vld [vmem:[#allocation7 + $0x30] sm:$0xf]
    %v142 = vld [vmem:[#allocation7 + $0x34] sm:$0xf]
    %v143 = vld [vmem:[#allocation7 + $0x38] sm:$0xf]
    %v144 = vld [vmem:[#allocation7 + $0x3c] sm:$0xf]
    %v145 = vld [vmem:[%s4] sm:$0x1]
    %v147 = vlaneseq
    %v148 = vshrl.u32 %v147, 7
    %v149 = vsub.s32 0, %v148
    %v150 = vrot.slane %v145, %v149
    %v168 = vunpack.c.l.b16 %v129
    %v169 = vunpack.c.l.b16 %v130
    %v170 = vunpack.c.l.b16 %v131
    %v171 = vunpack.c.l.b16 %v132
    %v172 = vunpack.c.l.b16 %v133
    %v173 = vunpack.c.l.b16 %v134
    %v174 = vunpack.c.l.b16 %v135
    %v175 = vunpack.c.l.b16 %v136
    %v176 = vunpack.c.l.b16 %v137
    %v177 = vunpack.c.l.b16 %v138
    %v178 = vunpack.c.l.b16 %v139
    %v179 = vunpack.c.l.b16 %v140
    %v180 = vunpack.c.l.b16 %v141
    %v181 = vunpack.c.l.b16 %v142
    %v182 = vunpack.c.l.b16 %v143
    %v183 = vunpack.c.l.b16 %v144
    %v184 = vpack.c.b16 %v169, %v168
    %v185 = vpack.c.b16 %v171, %v170
    %v186 = vpack.c.b16 %v173, %v172
    %v187 = vpack.c.b16 %v175, %v174
    %v188 = vpack.c.b16 %v177, %v176
    %v189 = vpack.c.b16 %v179, %v178
    %v190 = vpack.c.b16 %v181, %v180
    %v191 = vpack.c.b16 %v183, %v182
    %200 = vmatprep.subr.bf16.mxu0 0
    %201 = vmatpush1.bf16.msra.mxu0 %v184
    %202 = vmatprep.subr.bf16.mxu0 0
    %203 = vmatpush1.bf16.msra.mxu0 %v185
    %204 = vmatprep.subr.bf16.mxu0 0
    %205 = vmatpush1.bf16.msra.mxu0 %v186
    %206 = vmatprep.subr.bf16.mxu0 0
    %207 = vmatpush1.bf16.msra.mxu0 %v187
    %208 = vmatprep.subr.bf16.mxu0 0
    %209 = vmatpush1.bf16.msra.mxu0 %v188
    %210 = vmatprep.subr.bf16.mxu0 0
    %211 = vmatpush1.bf16.msra.mxu0 %v189
    %212 = vmatprep.subr.bf16.mxu0 0
    %213 = vmatpush1.bf16.msra.mxu0 %v190
    %214 = vmatprep.subr.bf16.mxu0 0
    %215 = vmatpush1.bf16.msra.mxu0 %v191
    %216 = vmatprep.subr.bf16.mxu0 0
    %217 = vmatpush1.bf16.msra.mxu0 0
    %218 = vmatprep.subr.bf16.mxu0 0
    %219 = vmatpush1.bf16.msra.mxu0 0
    %220 = vmatprep.subr.bf16.mxu0 0
    %221 = vmatpush1.bf16.msra.mxu0 0
    %222 = vmatprep.subr.bf16.mxu0 0
    %223 = vmatpush1.bf16.msra.mxu0 0
    %224 = vmatprep.subr.bf16.mxu0 0
    %225 = vmatpush1.bf16.msra.mxu0 0
    %226 = vmatprep.subr.bf16.mxu0 0
    %227 = vmatpush1.bf16.msra.mxu0 0
    %228 = vmatprep.subr.bf16.mxu0 0
    %229 = vmatpush1.bf16.msra.mxu0 0
    %230 = vmatprep.subr.bf16.mxu0 0
    %231 = vmatpush1.bf16.msra.mxu0 0
    %232 = vmatprep.mubr.bf16.mxu0 0
    %233 = vmatmul.mubr.bf16.gmra.mrb[0].mxu0 %v128
    %v234 = vpop.f32.mrb[0].mxu0
    %v235 = vadd.f32 %v150, %v234
    %v236 = vpop.f32.mrb[0].mxu0
    %v237 = vpop.f32.mrb[0].mxu0
    %v238 = vpop.f32.mrb[0].mxu0
    %239 = vdwg.mxu0
    %v240 = vmax.f32 %v235, 0.0
    %v241 = vld [vmem:[%s5] sm:$0x1]
    %v243 = vlaneseq
    %v244 = vshrl.u32 %v243, 7
    %v245 = vsub.s32 0, %v244
    %v246 = vrot.slane %v241, %v245
    %v248 = vmul.f32 %v240, %v246
    %249 = vadd.xlane.f32.xlu0 %v248
    %v250 = vpop.xlane.xlu0 %249
    %s251 = sld [smem:[#allocation2]]
    %v252 = vstv %s251
    %v253 = vadd.f32 %v250, %v252
    %vm254 = vcmask 7168
    %255 = vst.msk [vmem:[%s7] sm:$0xff] %vm254, %v253
    // Predicated region
    $region42: #{tpu_custom_call.1} parent=1 // pred_check
      _
    $region43: #{tpu_custom_call.1} parent=1 // pred_check_branch
      %257 = sbr.rel (0) target = $region45
    $region44: #{tpu_custom_call.1} parent=1 // pred_region
      _
    $region45: #{tpu_custom_call.1} parent=1 // pred_fallthru
      _
    // Predicated region
    $region46: #{tpu_custom_call.1} parent=1 // pred_check
      _
    $region47: #{tpu_custom_call.1} parent=1 // pred_check_branch
      %259 = sbr.rel (0) target = $region49
    $region48: #{tpu_custom_call.1} parent=1 // pred_region
      _
    $region49: #{tpu_custom_call.1} parent=1 // pred_fallthru
      _
    %260 = vsyncpa [#allocation4], 1
    %261 = vsyncpa [#allocation6], 1

</llo_original>
